<compile_context>
chip_gen: v7x
topology: tpu7x:2x2x1
jax: 0.10.0
libtpu: 0.0.40
codegen_flags: <defaults>
</compile_context>

<pallas_src>
import functools
import math

import jax
import jax.numpy as jnp
from jax.experimental import pallas as pl
from jax.experimental.pallas import tpu as pltpu


def _round_up(x, m):
    return ((x + m - 1) // m) * m


def _largest_divisor_tile(total, requested, mult=128):
    """Largest multiple of `mult` that divides `total` and is <= requested."""
    best = mult
    d = mult
    limit = min(total, max(requested, mult))
    while d <= limit:
        if total % d == 0:
            best = d
        d += mult
    return best


def _vmem_limit_bytes():
    try:
        kind = jax.devices()[0].device_kind.lower()
    except Exception:
        return 32 * 1024 * 1024
    if "v5" in kind or "v6" in kind:
        return 96 * 1024 * 1024   # 128 MiB physical VMEM
    if "v7" in kind:
        return 48 * 1024 * 1024   # 64 MiB physical VMEM — leave headroom
    return 32 * 1024 * 1024


# ---------------------------------------------------------------------------
# Kernel
# ---------------------------------------------------------------------------
def mlp_kernel(x_ref, w_ref, b_ref, o_ref, acc_ref):
    # x_ref:   (tm, tk)  row/K tile of the input
    # w_ref:   (tk, tn)  K/N slab of the pre-transposed weight (MXU-native)
    # b_ref:   (1,  tn)  bias slab (f32)
    # o_ref:   (tm, tn)  output tile (lane-dense last dim)
    # acc_ref: (tm, tn)  f32 accumulator scratch, reused across the K axis
    k = pl.program_id(2)

    @pl.when(k == 0)
    def _():
        acc_ref[...] = jnp.zeros_like(acc_ref)

    acc_ref[...] += jnp.dot(
        x_ref[...], w_ref[...], preferred_element_type=jnp.float32
    )

    @pl.when(k == pl.num_programs(2) - 1)
    def _():
        # Single VPU add of the bias on the f32 accumulator, then one cast.
        o_ref[...] = (acc_ref[...] + b_ref[...]).astype(o_ref.dtype)


# ---------------------------------------------------------------------------
# One-time parameter preparation (out of the hot path)
# ---------------------------------------------------------------------------
def prepare_mlp_params(weight, bias, *, compute_dtype=None):
    """Pad + pre-transpose nn.Linear params once.

    weight: (nclass, nhid) PyTorch layout  ->  w_t: (nhid_pad, nclass_pad)
    bias:   (nclass,)                      ->  b2d: (1, nclass_pad) f32
    Zero padding keeps the math exact; padded output columns are sliced off.
    """
    nclass, nhid = weight.shape
    nhid_pad = _round_up(nhid, 128)
    nclass_pad = _round_up(nclass, 128)
    w = jnp.pad(weight, ((0, nclass_pad - nclass), (0, nhid_pad - nhid)))
    w_t = jnp.asarray(w.T)  # (nhid_pad, nclass_pad), materialized once
    if compute_dtype is not None:
        w_t = w_t.astype(compute_dtype)
    b2d = jnp.pad(bias.astype(jnp.float32), (0, nclass_pad - nclass))
    b2d = b2d.reshape(1, nclass_pad)
    return w_t, b2d, int(nclass)


# ---------------------------------------------------------------------------
# Forward
# ---------------------------------------------------------------------------
@functools.partial(
    jax.jit,
    static_argnames=("nclass", "tm", "tn", "tk", "compute_dtype", "force_pallas"),
)
def mlp_forward(x, w_t, b2d, nclass, *, tm=512, tn=512, tk=512,
                compute_dtype=None, force_pallas=False):
    """y = x @ W^T + b with W pre-transposed/padded by prepare_mlp_params."""
    n, nhid = x.shape
    nhid_pad, nclass_pad = w_t.shape
    out_dtype = x.dtype

    # Tiny problems: fixed pallas_call + padding overhead dwarfs the MXU work.
    if not force_pallas and n * nclass_pad * nhid_pad < (1 << 18):
        y = x.astype(w_t.dtype) @ w_t[:nhid, :] + b2d
        return y[:, :nclass].astype(out_dtype)

    if compute_dtype is not None:
        x = x.astype(compute_dtype)
    row_mult = 16 if compute_dtype == jnp.bfloat16 else 8

    # --- tile selection (exact divisibility so no partial blocks) ----------
    tn = _largest_divisor_tile(nclass_pad, tn)
    tk = _largest_divisor_tile(nhid_pad, tk)
    tm = int(max(row_mult, min(tm, _round_up(n, row_mult))))
    tm = _round_up(tm, row_mult)
    # If both parallel axes collapse to one step, split M in two so v7x's
    # second TensorCore gets work (harmless on v5e/v6e).
    if _round_up(n, row_mult) <= tm and nclass_pad == tn and n > row_mult:
        tm = _round_up(-(-n // 2), row_mult)
    n_pad = _round_up(n, tm)

    # --- per-call padding of x only (zero rows/columns) --------------------
    if n_pad != n or nhid_pad != nhid:
        x = jnp.pad(x, ((0, n_pad - n), (0, nhid_pad - nhid)))

    grid = (n_pad // tm, nclass_pad // tn, nhid_pad // tk)

    out = pl.pallas_call(
        mlp_kernel,
        out_shape=jax.ShapeDtypeStruct((n_pad, nclass_pad), out_dtype),
        grid=grid,
        in_specs=[
            # x: (tm, tk) tile per (i, k); double-buffered by Pallas.
            pl.BlockSpec((tm, tk), lambda i, j, k: (i, k)),
            # W^T: (tk, tn) slab per (k, j) — streamed, never fully resident.
            pl.BlockSpec((tk, tn), lambda i, j, k: (k, j)),
            # bias: (1, tn) slab per j.
            pl.BlockSpec((1, tn), lambda i, j, k: (0, j)),
        ],
        out_specs=pl.BlockSpec((tm, tn), lambda i, j, k: (i, j)),
        scratch_shapes=[pltpu.VMEM((tm, tn), jnp.float32)],
        compiler_params=pltpu.CompilerParams(
            dimension_semantics=("parallel", "parallel", "arbitrary"),
            vmem_limit_bytes=_vmem_limit_bytes(),
        ),
    )(x, w_t, b2d)

    return out[:n, :nclass]


# ---------------------------------------------------------------------------
# Self-test
# ---------------------------------------------------------------------------
if __name__ == "__main__":
    key = jax.random.PRNGKey(0)
    k_x, k_w, k_b, k_x2, k_w2, k_b2 = jax.random.split(key, 6)

    # --- Test 1: small shapes consistent with the module (nhid=32, nclass=8).
    N, NHID, NCLASS = 8, 32, 8
    x = jax.random.normal(k_x, (N, NHID), dtype=jnp.float32)
    # reset_parameters(): weight ~ Normal(0, 0.05); bias keeps nn.Linear's
    # default Uniform(-1/sqrt(nhid), 1/sqrt(nhid)).
    weight = 0.05 * jax.random.normal(k_w, (NCLASS, NHID), dtype=jnp.float32)
    bound = 1.0 / math.sqrt(NHID)
    bias = jax.random.uniform(
        k_b, (NCLASS,), dtype=jnp.float32, minval=-bound, maxval=bound
    )

    w_t, b2d, nclass = prepare_mlp_params(weight, bias)
    out = mlp_forward(x, w_t, b2d, nclass, force_pallas=True)
    jax.block_until_ready(out)
    ref = x @ weight.T + bias
    assert out.shape == (N, NCLASS)
    assert jnp.allclose(out, ref, atol=1e-5), "mismatch vs reference (test 1)"

    # --- Test 2: non-aligned shapes + small tiles to exercise the full
    #     M/N/K-tiled accumulator path (multiple grid steps on every axis).
    N2, NHID2, NCLASS2 = 72, 300, 200
    x2 = jax.random.normal(k_x2, (N2, NHID2), dtype=jnp.float32)
    weight2 = 0.05 * jax.random.normal(k_w2, (NCLASS2, NHID2), dtype=jnp.float32)
    bound2 = 1.0 / math.sqrt(NHID2)
    bias2 = jax.random.uniform(
        k_b2, (NCLASS2,), dtype=jnp.float32, minval=-bound2, maxval=bound2
    )

    w_t2, b2d2, nclass2 = prepare_mlp_params(weight2, bias2)
    out2 = mlp_forward(
        x2, w_t2, b2d2, nclass2, tm=32, tn=128, tk=128, force_pallas=True
    )
    jax.block_until_ready(out2)
    ref2 = x2 @ weight2.T + bias2
    assert out2.shape == (N2, NCLASS2)
    assert jnp.allclose(out2, ref2, atol=1e-4, rtol=1e-4), "mismatch (test 2)"

    print("KERNEL_OK")
</pallas_src>

<mosaic_0001>
module attributes {stable_mosaic.version = 11 : i64} {
  func.func @mlp_kernel(%arg0: i32, %arg1: i32, %arg2: i32, %arg3: memref<8x128xf32, #tpu.memory_space<vmem>>, %arg4: memref<128x128xf32, #tpu.memory_space<vmem>>, %arg5: memref<1x128xf32, #tpu.memory_space<vmem>>, %arg6: memref<8x128xf32, #tpu.memory_space<vmem>>, %arg7: memref<8x128xf32, #tpu.memory_space<vmem>>) attributes {dimension_semantics = [#tpu.dimension_semantics<parallel>, #tpu.dimension_semantics<parallel>, #tpu.dimension_semantics<arbitrary>], iteration_bounds = array<i64: 1, 1, 1>, scalar_prefetch = 0 : i64, scratch_operands = 1 : i64, tpu.core_type = #tpu.core_type<tc>, window_params = [{transform_indices = @transform_0, window_bounds = array<i64: 8, 128>}, {transform_indices = @transform_1, window_bounds = array<i64: 128, 128>}, {transform_indices = @transform_2, window_bounds = array<i64: 1, 128>}, {transform_indices = @transform_3, window_bounds = array<i64: 8, 128>}]} {
    %c0_i32 = arith.constant 0 : i32
    %0 = arith.cmpi eq, %arg2, %c0_i32 : i32
    %1 = arith.extui %0 : i1 to i32
    %c0_i32_0 = arith.constant 0 : i32
    %2 = arith.cmpi ne, %1, %c0_i32_0 : i32
    scf.if %2 {
      %cst_10 = arith.constant 0.000000e+00 : f32
      %12 = vector.broadcast %cst_10 : f32 to vector<8x128xf32>
      %c0_11 = arith.constant 0 : index
      %c0_12 = arith.constant 0 : index
      %13 = vector.load %arg7[%c0_11, %c0_12] : memref<8x128xf32, #tpu.memory_space<vmem>>, vector<8x128xf32>
      tpu.vector_store %arg7[%c0_11, %c0_12], %12 {strides = array<i32>} : memref<8x128xf32, #tpu.memory_space<vmem>>, vector<8x128xf32>,
    } else {
    }
    %c0 = arith.constant 0 : index
    %c0_1 = arith.constant 0 : index
    %3 = vector.load %arg7[%c0, %c0_1] : memref<8x128xf32, #tpu.memory_space<vmem>>, vector<8x128xf32>
    %c0_2 = arith.constant 0 : index
    %c0_3 = arith.constant 0 : index
    %4 = vector.load %arg3[%c0_2, %c0_3] : memref<8x128xf32, #tpu.memory_space<vmem>>, vector<8x128xf32>
    %c0_4 = arith.constant 0 : index
    %c0_5 = arith.constant 0 : index
    %5 = vector.load %arg4[%c0_4, %c0_5] : memref<128x128xf32, #tpu.memory_space<vmem>>, vector<128x128xf32>
    %cst = arith.constant dense<0.000000e+00> : vector<8x128xf32>
    %6 = tpu.matmul %4, %5, %cst {dimension_numbers = #tpu.dot_dimension_numbers<[1], [0], [0], [1], [0, 0, 1, 1], [], []>} : vector<8x128xf32>, vector<128x128xf32>, vector<8x128xf32> -> vector<8x128xf32>
    %7 = arith.addf %3, %6 : vector<8x128xf32>
    %c0_6 = arith.constant 0 : index
    %c0_7 = arith.constant 0 : index
    %8 = vector.load %arg7[%c0_6, %c0_7] : memref<8x128xf32, #tpu.memory_space<vmem>>, vector<8x128xf32>
    tpu.vector_store %arg7[%c0_6, %c0_7], %7 {strides = array<i32>} : memref<8x128xf32, #tpu.memory_space<vmem>>, vector<8x128xf32>,
    %c0_i32_8 = arith.constant 0 : i32
    %9 = arith.cmpi eq, %arg2, %c0_i32_8 : i32
    %10 = arith.extui %9 : i1 to i32
    %c0_i32_9 = arith.constant 0 : i32
    %11 = arith.cmpi ne, %10, %c0_i32_9 : i32
    scf.if %11 {
      %c0_10 = arith.constant 0 : index
      %c0_11 = arith.constant 0 : index
      %12 = vector.load %arg7[%c0_10, %c0_11] : memref<8x128xf32, #tpu.memory_space<vmem>>, vector<8x128xf32>
      %c0_12 = arith.constant 0 : index
      %c0_13 = arith.constant 0 : index
      %13 = vector.load %arg5[%c0_12, %c0_13] : memref<1x128xf32, #tpu.memory_space<vmem>>, vector<1x128xf32>
      %14 = vector.broadcast %13 : vector<1x128xf32> to vector<8x128xf32>
      %15 = arith.addf %12, %14 : vector<8x128xf32>
      %c0_14 = arith.constant 0 : index
      %c0_15 = arith.constant 0 : index
      %16 = vector.load %arg6[%c0_14, %c0_15] : memref<8x128xf32, #tpu.memory_space<vmem>>, vector<8x128xf32>
      tpu.vector_store %arg6[%c0_14, %c0_15], %15 {strides = array<i32>} : memref<8x128xf32, #tpu.memory_space<vmem>>, vector<8x128xf32>,
    } else {
    }
    return
  }
  func.func @transform_0(%arg0: i32, %arg1: i32, %arg2: i32) -> (i32, i32) {
    %c0_i32 = arith.constant 0 : i32
    return %arg0, %arg2 : i32, i32
  }
  func.func @transform_1(%arg0: i32, %arg1: i32, %arg2: i32) -> (i32, i32) {
    %c0_i32 = arith.constant 0 : i32
    return %arg2, %arg1 : i32, i32
  }
  func.func @transform_2(%arg0: i32, %arg1: i32, %arg2: i32) -> (i32, i32) {
    %c0_i32 = arith.constant 0 : i32
    %c0_i32_0 = arith.constant 0 : i32
    return %c0_i32, %arg1 : i32, i32
  }
  func.func @transform_3(%arg0: i32, %arg1: i32, %arg2: i32) -> (i32, i32) {
    %c0_i32 = arith.constant 0 : i32
    return %arg0, %arg1 : i32, i32
  }
}

</mosaic_0001>

<llo_original>
// kernel: mlp_forward.1
$region0: #{mlp_forward.1}
  #allocation0 [shape = 'u32[]', space=smem, size = 0x4, offset = 0x4, fixed_abs, tag = 'smem constant byte address 0x4 - core index']
  #allocation1 [shape = 'u32[144,128]{1,0:T(1,128)}', space=vmem, size = 0x12000, scoped, tag = 'internal scratch']
  #allocation2 [shape = 'f32[8,128]{1,0:T(8,128)}', space=vmem, size = 0x1000, scoped, tag = 'scratch operand']
  %s0 = inlined_call_operand.vmem [shape: f32[8,128], index: 0, kind: input, shape index: {}]
  %s1 = inlined_call_operand.hbm [shape: f32[128,128], index: 1, kind: input, shape index: {}]
  %s2 = inlined_call_operand.vmem [shape: f32[1,128], index: 2, kind: input, shape index: {}]
  %s3 = inlined_call_operand.hbm [shape: f32[8,128], index: 3, kind: output, shape index: {}]
  %s4 = sld [smem:[#allocation0]]
  $region34: #{mlp_forward.1} parent=0
    _
  %s6 = ssub.s32 1, %s4
  %s7 = scalar_select 0, %s6, %s4
  $region1: #{mlp_forward.1} parent=0
    #allocation3 [shape = 'u8[65536]{0}', space=vmem, size = 0x10000, scoped, tag = 'input window, operand 1, single buffered']
    #allocation4 [shape = 's32[1]{0}', space=sflag, size = 0x4, scoped, tag = 'scoped memory for mlp_forward.1']
    #allocation5 [shape = 's32[1]{0}', space=sflag, size = 0x4, scoped, tag = 'scoped memory for mlp_forward.1']
    #allocation6 [shape = 'u8[4096]{0}', space=vmem, size = 0x1000, scoped, tag = 'output window, operand 0, single buffered']
    %8 = vsyncpa [#allocation4], 0
    %9 = vsyncpa [#allocation5], 0
    // Predicated region
    $region2: #{mlp_forward.1} parent=1 // pred_check
      _
    $region3: #{mlp_forward.1} parent=1 // pred_check_branch
      %11 = sbr.rel (0) target = $region5
    $region4: #{mlp_forward.1} parent=1 // pred_region
      _
    $region5: #{mlp_forward.1} parent=1 // pred_fallthru
      _
    // Predicated region
    $region6: #{mlp_forward.1} parent=1 // pred_check
      _
    $region7: #{mlp_forward.1} parent=1 // pred_check_branch
      %13 = sbr.rel (0) target = $region9
    $region8: #{mlp_forward.1} parent=1 // pred_region
      %s15 = ssub.s32 2048, 2048
      %16 = vsyncadd [#allocation4], %s15
      %s17 = sshll.u32 [#allocation3], 4
      %s18 = int_to_ptr.vmem [resolvable:$true] %s17
      %23 = dma.hbm_to_vmem [thread:$0]  %s1, 2048, %s18, [#allocation4], 128, 128, 8
    $region9: #{mlp_forward.1} parent=1 // pred_fallthru
      _
    // Predicated region
    $region10: #{mlp_forward.1} parent=1 // pred_check
      _
    $region11: #{mlp_forward.1} parent=1 // pred_check_branch
      %25 = sbr.rel (0) target = $region13
    $region12: #{mlp_forward.1} parent=1 // pred_region
      _
    $region13: #{mlp_forward.1} parent=1 // pred_fallthru
      _
    // Predicated region
    $region14: #{mlp_forward.1} parent=1 // pred_check
      _
    $region15: #{mlp_forward.1} parent=1 // pred_check_branch
      %27 = sbr.rel (0) target = $region17
    $region16: #{mlp_forward.1} parent=1 // pred_region
      %28 = dma.done [#allocation4], 2048
    $region17: #{mlp_forward.1} parent=1 // pred_fallthru
      _
    %p29 = scmp.eq.s32.totalorder 0, 0
    // Predicated region
    $region18: #{mlp_forward.1} parent=1 // pred_check
      %p30 = pneg %p29
    $region19: #{mlp_forward.1} parent=1 // pred_check_branch
      %32 = sbr.rel (%p30) target = $region21
    $region20: #{mlp_forward.1} parent=1 // pred_region
      %33 = vst [vmem:[#allocation2] sm:$0xff] 0.0
    $region21: #{mlp_forward.1} parent=1 // pred_fallthru
      _
    %v34 = vld [vmem:[#allocation2] sm:$0xff]
    %v35 = vld [vmem:[%s0] sm:$0xff]
    %v36 = vld [vmem:[#allocation3] sm:$0xff]
    %v37 = vld [vmem:[#allocation3 + $0x8] sm:$0xff]
    %v38 = vld [vmem:[#allocation3 + $0x10] sm:$0xff]
    %v39 = vld [vmem:[#allocation3 + $0x18] sm:$0xff]
    %v40 = vld [vmem:[#allocation3 + $0x20] sm:$0xff]
    %v41 = vld [vmem:[#allocation3 + $0x28] sm:$0xff]
    %v42 = vld [vmem:[#allocation3 + $0x30] sm:$0xff]
    %v43 = vld [vmem:[#allocation3 + $0x38] sm:$0xff]
    %v44 = vld [vmem:[#allocation3 + $0x40] sm:$0xff]
    %v45 = vld [vmem:[#allocation3 + $0x48] sm:$0xff]
    %v46 = vld [vmem:[#allocation3 + $0x50] sm:$0xff]
    %v47 = vld [vmem:[#allocation3 + $0x58] sm:$0xff]
    %v48 = vld [vmem:[#allocation3 + $0x60] sm:$0xff]
    %v49 = vld [vmem:[#allocation3 + $0x68] sm:$0xff]
    %v50 = vld [vmem:[#allocation3 + $0x70] sm:$0xff]
    %v51 = vld [vmem:[#allocation3 + $0x78] sm:$0xff]
    %52 = vmatprep.subr.mxu0 0.0
    %53 = vmatpush1.msra.mxu0 %v36
    %54 = vmatprep.subr.mxu0 0.0
    %55 = vmatpush1.msra.mxu0 %v37
    %56 = vmatprep.subr.mxu0 0.0
    %57 = vmatpush1.msra.mxu0 %v38
    %58 = vmatprep.subr.mxu0 0.0
    %59 = vmatpush1.msra.mxu0 %v39
    %60 = vmatprep.subr.mxu0 0.0
    %61 = vmatpush1.msra.mxu0 %v40
    %62 = vmatprep.subr.mxu0 0.0
    %63 = vmatpush1.msra.mxu0 %v41
    %64 = vmatprep.subr.mxu0 0.0
    %65 = vmatpush1.msra.mxu0 %v42
    %66 = vmatprep.subr.mxu0 0.0
    %67 = vmatpush1.msra.mxu0 %v43
    %68 = vmatprep.subr.mxu0 0.0
    %69 = vmatpush1.msra.mxu0 %v44
    %70 = vmatprep.subr.mxu0 0.0
    %71 = vmatpush1.msra.mxu0 %v45
    %72 = vmatprep.subr.mxu0 0.0
    %73 = vmatpush1.msra.mxu0 %v46
    %74 = vmatprep.subr.mxu0 0.0
    %75 = vmatpush1.msra.mxu0 %v47
    %76 = vmatprep.subr.mxu0 0.0
    %77 = vmatpush1.msra.mxu0 %v48
    %78 = vmatprep.subr.mxu0 0.0
    %79 = vmatpush1.msra.mxu0 %v49
    %80 = vmatprep.subr.mxu0 0.0
    %81 = vmatpush1.msra.mxu0 %v50
    %82 = vmatprep.subr.mxu0 0.0
    %83 = vmatpush1.msra.mxu0 %v51
    %84 = vmatprep.subr.mxu0 0.0
    %85 = vmatpush1.msra.mxu0 0.0
    %86 = vmatprep.subr.mxu0 0.0
    %87 = vmatpush1.msra.mxu0 0.0
    %88 = vmatprep.subr.mxu0 0.0
    %89 = vmatpush1.msra.mxu0 0.0
    %90 = vmatprep.subr.mxu0 0.0
    %91 = vmatpush1.msra.mxu0 0.0
    %92 = vmatprep.subr.mxu0 0.0
    %93 = vmatpush1.msra.mxu0 0.0
    %94 = vmatprep.subr.mxu0 0.0
    %95 = vmatpush1.msra.mxu0 0.0
    %96 = vmatprep.subr.mxu0 0.0
    %97 = vmatpush1.msra.mxu0 0.0
    %98 = vmatprep.subr.mxu0 0.0
    %99 = vmatpush1.msra.mxu0 0.0
    %100 = vmatprep.subr.mxu0 0.0
    %101 = vmatpush1.msra.mxu0 0.0
    %102 = vmatprep.subr.mxu0 0.0
    %103 = vmatpush1.msra.mxu0 0.0
    %104 = vmatprep.subr.mxu0 0.0
    %105 = vmatpush1.msra.mxu0 0.0
    %106 = vmatprep.subr.mxu0 0.0
    %107 = vmatpush1.msra.mxu0 0.0
    %108 = vmatprep.subr.mxu0 0.0
    %109 = vmatpush1.msra.mxu0 0.0
    %110 = vmatprep.subr.mxu0 0.0
    %111 = vmatpush1.msra.mxu0 0.0
    %112 = vmatprep.subr.mxu0 0.0
    %113 = vmatpush1.msra.mxu0 0.0
    %114 = vmatprep.subr.mxu0 0.0
    %115 = vmatpush1.msra.mxu0 0.0
    %116 = vmatprep.mubr.f32.mxu0 0.0
    %117 = vmatmul.mubr.f32.gmra.mrb[0].mxu0 %v35
    %v118 = vpop.f32.mrb[0].mxu0
    %v119 = vadd.f32 0.0, %v118
    %v120 = vpop.f32.mrb[0].mxu0
    %121 = vdwg.mxu0
    %v122 = vadd.f32 %v34, %v119
    %123 = vst [vmem:[#allocation2] sm:$0xff] %v122
    // Predicated region
    $region22: #{mlp_forward.1} parent=1 // pred_check
      %p124 = pneg %p29
    $region23: #{mlp_forward.1} parent=1 // pred_check_branch
      %126 = sbr.rel (%p124) target = $region25
    $region24: #{mlp_forward.1} parent=1 // pred_region
      %v127 = vld [vmem:[#allocation2] sm:$0xff]
      %v128 = vld [vmem:[%s2] sm:$0x1]
      %v130 = vlaneseq
      %v131 = vshrl.u32 %v130, 7
      %v132 = vsub.s32 0, %v131
      %v133 = vrot.slane %v128, %v132
      %v135 = vadd.f32 %v127, %v133
      %136 = vst [vmem:[#allocation6] sm:$0xff] %v135
    $region25: #{mlp_forward.1} parent=1 // pred_fallthru
      _
    // Predicated region
    $region26: #{mlp_forward.1} parent=1 // pred_check
      _
    $region27: #{mlp_forward.1} parent=1 // pred_check_branch
      %138 = sbr.rel (0) target = $region29
    $region28: #{mlp_forward.1} parent=1 // pred_region
      %s140 = ssub.s32 128, 128
      %141 = vsyncadd [#allocation5], %s140
      %s143 = sshll.u32 [#allocation6], 4
      %s144 = int_to_ptr.vmem [resolvable:$true] %s143
      %146 = dma.vmem_to_hbm [thread:$0]  %s144, 128, %s3, [#allocation5]
    $region29: #{mlp_forward.1} parent=1 // pred_fallthru
      _
    // Predicated region
    $region30: #{mlp_forward.1} parent=1 // pred_check
      _
    $region31: #{mlp_forward.1} parent=1 // pred_check_branch
      %148 = sbr.rel (0) target = $region33
    $region32: #{mlp_forward.1} parent=1 // pred_region
      %149 = dma.done [#allocation5], 128
    $region33: #{mlp_forward.1} parent=1 // pred_fallthru
      _
    %150 = vsyncpa [#allocation4], 1
    %151 = vsyncpa [#allocation5], 1

</llo_original>
